<compile_context>
chip_gen: v7x
topology: tpu7x:2x2x1
jax: 0.10.0
libtpu: 0.0.40
codegen_flags: <defaults>
</compile_context>

<pallas_src>
import functools

import jax
import jax.numpy as jnp
from jax.experimental import pallas as pl
from jax.experimental.pallas import tpu as pltpu


def _round_up(x, m):
    return ((x + m - 1) // m) * m


def _head_kernel(feat_ref, w1_ref, b1_ref, w2_ref, b2_ref, out_ref, acc_ref,
                 *, inv_s):
    s = pl.program_id(1)

    @pl.when(s == 0)
    def _():
        acc_ref[...] = jnp.zeros_like(acc_ref)

    # Accumulate raw sequence sums in f32 (in-register reduce, no HBM traffic).
    acc_ref[...] += jnp.sum(feat_ref[...], axis=1, dtype=jnp.float32)

    @pl.when(s == pl.num_programs(1) - 1)
    def _():
        pooled = acc_ref[...] * inv_s                              # mean over S
        h = jnp.dot(pooled, w1_ref[...], preferred_element_type=jnp.float32)
        h = jnp.tanh(h + b1_ref[...].astype(jnp.float32))
        # dropout: identity at inference time (eval mode).
        # TODO(synk): training-mode dropout (pltpu.prng_random_bits mask) not emitted.
        logits = jnp.dot(h, w2_ref[...], preferred_element_type=jnp.float32)
        logits = logits + b2_ref[...].astype(jnp.float32)
        out_ref[...] = logits.astype(out_ref.dtype)


def sentiment_roberta_head(features, w1, b1, w2, b2):
    """features: (B,S,H); w1: (H,H); b1: (H,)/(1,H); w2: (H,L); b2: (L,)/(1,L)."""
    B, S, H = features.shape
    L = w2.shape[1]
    b1 = b1.reshape(1, H)
    b2 = b2.reshape(1, L)

    itemsize = features.dtype.itemsize

    # ---- lane-dense paddings (zeros are exact no-ops, sliced away later) ----
    H_pad = _round_up(H, 128)
    L_pad = _round_up(L, 128)

    # ---- batch tile ----------------------------------------------------------
    tb = min(128, _round_up(B, 8))
    # v7x megacore: make sure the "parallel" axis has >= 2 programs when B allows.
    if B > 8 and pl.cdiv(B, tb) < 2:
        tb = max(8, _round_up(pl.cdiv(B, 2), 8))

    # ---- VMEM budget, re-derived from the chip's physical VMEM ---------------
    try:
        phys_vmem = int(pltpu.get_tpu_info().vmem_capacity_bytes)
    except Exception:
        phys_vmem = 64 * 1024 * 1024          # v7x-safe assumption
    vmem_limit = min(phys_vmem * 3 // 4, 96 * 1024 * 1024)

    w_bytes = ((H_pad * H_pad + H_pad) * w1.dtype.itemsize
               + (H_pad * L_pad + L_pad) * w2.dtype.itemsize)

    def _seq_tile(tb_):
        # Conservative budget: assume weights double-buffered (fallback path),
        # plus f32 accumulator, double-buffered output tile, fixed headroom.
        fixed = 2 * w_bytes + tb_ * H_pad * 4 + 2 * tb_ * L_pad * 4 + (2 << 20)
        budget = vmem_limit - fixed
        if budget <= 0:
            return 0
        per_row = 2 * tb_ * H_pad * itemsize   # double-buffered feature bytes / seq row
        return (budget // per_row) // 8 * 8

    ts = _seq_tile(tb)
    while ts < 8 and tb > 8:
        tb = max(8, _round_up(tb // 2, 8))
        ts = _seq_tile(tb)
    ts = int(max(8, min(ts, _round_up(S, 8))))

    B_pad = _round_up(B, tb)
    S_pad = _round_up(S, ts)

    # ---- zero-pad operands ----------------------------------------------------
    feats_p = features
    if (B_pad, S_pad, H_pad) != (B, S, H):
        feats_p = jnp.pad(features,
                          ((0, B_pad - B), (0, S_pad - S), (0, H_pad - H)))
    w1_p = jnp.pad(w1, ((0, H_pad - H), (0, H_pad - H))) if H_pad != H else w1
    b1_p = jnp.pad(b1, ((0, 0), (0, H_pad - H))) if H_pad != H else b1
    w2_p = (jnp.pad(w2, ((0, H_pad - H), (0, L_pad - L)))
            if (H_pad, L_pad) != (H, L) else w2)
    b2_p = jnp.pad(b2, ((0, 0), (0, L_pad - L))) if L_pad != L else b2

    grid = (B_pad // tb, S_pad // ts)

    flops = (2 * B_pad * S_pad * H_pad
             + 2 * B_pad * H_pad * H_pad
             + 2 * B_pad * H_pad * L_pad)
    bytes_accessed = (feats_p.size * feats_p.dtype.itemsize
                      + w1_p.size * w1_p.dtype.itemsize
                      + b1_p.size * b1_p.dtype.itemsize
                      + w2_p.size * w2_p.dtype.itemsize
                      + b2_p.size * b2_p.dtype.itemsize
                      + B_pad * L_pad * 4)
    cost = pl.CostEstimate(flops=int(flops),
                           transcendentals=int(B_pad * H_pad),
                           bytes_accessed=int(bytes_accessed))

    kernel = functools.partial(_head_kernel, inv_s=float(1.0 / S))

    def build(single_buffer_weights):
        def wspec(shape):
            if single_buffer_weights:
                return pl.BlockSpec(shape, lambda i, s: (0, 0),
                                    pipeline_mode=pl.Buffered(1))
            return pl.BlockSpec(shape, lambda i, s: (0, 0))

        return pl.pallas_call(
            kernel,
            out_shape=jax.ShapeDtypeStruct((B_pad, L_pad), jnp.float32),
            grid=grid,
            in_specs=[
                pl.BlockSpec((tb, ts, H_pad), lambda i, s: (i, s, 0)),  # features
                wspec((H_pad, H_pad)),   # dense weight   (resident)
                wspec((1, H_pad)),       # dense bias     (resident)
                wspec((H_pad, L_pad)),   # out_proj weight (resident, lane-padded)
                wspec((1, L_pad)),       # out_proj bias   (resident, lane-padded)
            ],
            out_specs=pl.BlockSpec((tb, L_pad), lambda i, s: (i, 0)),
            scratch_shapes=[pltpu.VMEM((tb, H_pad), jnp.float32)],
            compiler_params=pltpu.CompilerParams(
                dimension_semantics=("parallel", "arbitrary"),
                vmem_limit_bytes=int(vmem_limit)),
            cost_estimate=cost,
        )

    args = (feats_p, w1_p, b1_p, w2_p, b2_p)
    use_single_buffer = hasattr(pl, "Buffered")
    try:
        out = build(use_single_buffer)(*args)
    except Exception:
        if not use_single_buffer:
            raise
        # Fallback: default double-buffered weights (correct, a bit more VMEM).
        out = build(False)(*args)

    return out[:B, :L]


def reference(features, w1, b1, w2, b2):
    x = jnp.mean(features, axis=1)
    x = jnp.tanh(x @ w1 + b1.reshape(1, -1))
    return x @ w2 + b2.reshape(1, -1)


if __name__ == "__main__":
    # Config (synthetic, deterministic): hidden_size=32, num_labels=3,
    # batch=2, seq=8.
    B, S, H, L = 2, 8, 32, 3

    key = jax.random.PRNGKey(0)
    k_feat, k_w1, k_b1, k_w2, k_b2 = jax.random.split(key, 5)

    features = jax.random.normal(k_feat, (B, S, H), dtype=jnp.float32)
    # nn.Linear-style init scale (deterministic, synthetic).
    w1 = jax.random.uniform(k_w1, (H, H), jnp.float32, -1.0, 1.0) / jnp.sqrt(H)
    b1 = jax.random.uniform(k_b1, (1, H), jnp.float32, -1.0, 1.0) / jnp.sqrt(H)
    w2 = jax.random.uniform(k_w2, (H, L), jnp.float32, -1.0, 1.0) / jnp.sqrt(H)
    b2 = jax.random.uniform(k_b2, (1, L), jnp.float32, -1.0, 1.0) / jnp.sqrt(H)

    out = sentiment_roberta_head(features, w1, b1, w2, b2)
    out = jax.block_until_ready(out)

    ref = reference(features, w1, b1, w2, b2)
    assert out.shape == (B, L), out.shape
    assert jnp.allclose(out, ref, atol=1e-5, rtol=1e-5), float(
        jnp.max(jnp.abs(out - ref)))

    print("KERNEL_OK")
</pallas_src>

<mosaic_0001>
module attributes {stable_mosaic.version = 11 : i64} {
  func.func @_head_kernel(%arg0: i32, %arg1: i32, %arg2: memref<8x8x128xf32, #tpu.memory_space<vmem>>, %arg3: memref<128x128xf32, #tpu.memory_space<vmem>>, %arg4: memref<1x128xf32, #tpu.memory_space<vmem>>, %arg5: memref<128x128xf32, #tpu.memory_space<vmem>>, %arg6: memref<1x128xf32, #tpu.memory_space<vmem>>, %arg7: memref<8x128xf32, #tpu.memory_space<vmem>>, %arg8: memref<8x128xf32, #tpu.memory_space<vmem>>) attributes {dimension_semantics = [#tpu.dimension_semantics<parallel>, #tpu.dimension_semantics<arbitrary>], iteration_bounds = array<i64: 1, 1>, scalar_prefetch = 0 : i64, scratch_operands = 1 : i64, tpu.core_type = #tpu.core_type<tc>, window_params = [{transform_indices = @transform_0, window_bounds = array<i64: 8, 8, 128>}, {pipeline_mode = #tpu.pipeline_mode<synchronous>, transform_indices = @transform_1, window_bounds = array<i64: 128, 128>}, {pipeline_mode = #tpu.pipeline_mode<synchronous>, transform_indices = @transform_2, window_bounds = array<i64: 1, 128>}, {pipeline_mode = #tpu.pipeline_mode<synchronous>, transform_indices = @transform_3, window_bounds = array<i64: 128, 128>}, {pipeline_mode = #tpu.pipeline_mode<synchronous>, transform_indices = @transform_4, window_bounds = array<i64: 1, 128>}, {transform_indices = @transform_5, window_bounds = array<i64: 8, 128>}]} {
    %c0_i32 = arith.constant 0 : i32
    %0 = arith.cmpi eq, %arg1, %c0_i32 : i32
    %1 = arith.extui %0 : i1 to i32
    %c0_i32_0 = arith.constant 0 : i32
    %2 = arith.cmpi ne, %1, %c0_i32_0 : i32
    scf.if %2 {
      %cst_9 = arith.constant 0.000000e+00 : f32
      %11 = vector.broadcast %cst_9 : f32 to vector<8x128xf32>
      %c0_10 = arith.constant 0 : index
      %c0_11 = arith.constant 0 : index
      %12 = vector.load %arg8[%c0_10, %c0_11] : memref<8x128xf32, #tpu.memory_space<vmem>>, vector<8x128xf32>
      tpu.vector_store %arg8[%c0_10, %c0_11], %11 {strides = array<i32>} : memref<8x128xf32, #tpu.memory_space<vmem>>, vector<8x128xf32>,
    } else {
    }
    %c0 = arith.constant 0 : index
    %c0_1 = arith.constant 0 : index
    %3 = vector.load %arg8[%c0, %c0_1] : memref<8x128xf32, #tpu.memory_space<vmem>>, vector<8x128xf32>
    %c0_2 = arith.constant 0 : index
    %c0_3 = arith.constant 0 : index
    %c0_4 = arith.constant 0 : index
    %4 = vector.load %arg2[%c0_2, %c0_3, %c0_4] : memref<8x8x128xf32, #tpu.memory_space<vmem>>, vector<8x8x128xf32>
    %cst = arith.constant dense<0.000000e+00> : vector<8x128xf32>
    %5 = vector.multi_reduction <add>, %4, %cst [1] : vector<8x8x128xf32> to vector<8x128xf32>
    %6 = arith.addf %3, %5 : vector<8x128xf32>
    %c0_5 = arith.constant 0 : index
    %c0_6 = arith.constant 0 : index
    %7 = vector.load %arg8[%c0_5, %c0_6] : memref<8x128xf32, #tpu.memory_space<vmem>>, vector<8x128xf32>
    tpu.vector_store %arg8[%c0_5, %c0_6], %6 {strides = array<i32>} : memref<8x128xf32, #tpu.memory_space<vmem>>, vector<8x128xf32>,
    %c0_i32_7 = arith.constant 0 : i32
    %8 = arith.cmpi eq, %arg1, %c0_i32_7 : i32
    %9 = arith.extui %8 : i1 to i32
    %c0_i32_8 = arith.constant 0 : i32
    %10 = arith.cmpi ne, %9, %c0_i32_8 : i32
    scf.if %10 {
      %c0_9 = arith.constant 0 : index
      %c0_10 = arith.constant 0 : index
      %11 = vector.load %arg8[%c0_9, %c0_10] : memref<8x128xf32, #tpu.memory_space<vmem>>, vector<8x128xf32>
      %cst_11 = arith.constant 1.250000e-01 : f32
      %12 = vector.broadcast %cst_11 : f32 to vector<8x128xf32>
      %13 = arith.mulf %11, %12 : vector<8x128xf32>
      %c0_12 = arith.constant 0 : index
      %c0_13 = arith.constant 0 : index
      %14 = vector.load %arg3[%c0_12, %c0_13] : memref<128x128xf32, #tpu.memory_space<vmem>>, vector<128x128xf32>
      %cst_14 = arith.constant dense<0.000000e+00> : vector<8x128xf32>
      %15 = tpu.matmul %13, %14, %cst_14 {dimension_numbers = #tpu.dot_dimension_numbers<[1], [0], [0], [1], [0, 0, 1, 1], [], []>} : vector<8x128xf32>, vector<128x128xf32>, vector<8x128xf32> -> vector<8x128xf32>
      %c0_15 = arith.constant 0 : index
      %c0_16 = arith.constant 0 : index
      %16 = vector.load %arg4[%c0_15, %c0_16] : memref<1x128xf32, #tpu.memory_space<vmem>>, vector<1x128xf32>
      %17 = vector.broadcast %16 : vector<1x128xf32> to vector<8x128xf32>
      %18 = arith.addf %15, %17 : vector<8x128xf32>
      %19 = math.tanh %18 : vector<8x128xf32>
      %c0_17 = arith.constant 0 : index
      %c0_18 = arith.constant 0 : index
      %20 = vector.load %arg5[%c0_17, %c0_18] : memref<128x128xf32, #tpu.memory_space<vmem>>, vector<128x128xf32>
      %cst_19 = arith.constant dense<0.000000e+00> : vector<8x128xf32>
      %21 = tpu.matmul %19, %20, %cst_19 {dimension_numbers = #tpu.dot_dimension_numbers<[1], [0], [0], [1], [0, 0, 1, 1], [], []>} : vector<8x128xf32>, vector<128x128xf32>, vector<8x128xf32> -> vector<8x128xf32>
      %c0_20 = arith.constant 0 : index
      %c0_21 = arith.constant 0 : index
      %22 = vector.load %arg6[%c0_20, %c0_21] : memref<1x128xf32, #tpu.memory_space<vmem>>, vector<1x128xf32>
      %23 = vector.broadcast %22 : vector<1x128xf32> to vector<8x128xf32>
      %24 = arith.addf %21, %23 : vector<8x128xf32>
      %c0_22 = arith.constant 0 : index
      %c0_23 = arith.constant 0 : index
      %25 = vector.load %arg7[%c0_22, %c0_23] : memref<8x128xf32, #tpu.memory_space<vmem>>, vector<8x128xf32>
      tpu.vector_store %arg7[%c0_22, %c0_23], %24 {strides = array<i32>} : memref<8x128xf32, #tpu.memory_space<vmem>>, vector<8x128xf32>,
    } else {
    }
    return
  }
  func.func @transform_0(%arg0: i32, %arg1: i32) -> (i32, i32, i32) {
    %c0_i32 = arith.constant 0 : i32
    %c0_i32_0 = arith.constant 0 : i32
    return %arg0, %arg1, %c0_i32 : i32, i32, i32
  }
  func.func @transform_1(%arg0: i32, %arg1: i32) -> (i32, i32) {
    %c0_i32 = arith.constant 0 : i32
    %c0_i32_0 = arith.constant 0 : i32
    %c0_i32_1 = arith.constant 0 : i32
    return %c0_i32, %c0_i32_0 : i32, i32
  }
  func.func @transform_2(%arg0: i32, %arg1: i32) -> (i32, i32) {
    %c0_i32 = arith.constant 0 : i32
    %c0_i32_0 = arith.constant 0 : i32
    %c0_i32_1 = arith.constant 0 : i32
    return %c0_i32, %c0_i32_0 : i32, i32
  }
  func.func @transform_3(%arg0: i32, %arg1: i32) -> (i32, i32) {
    %c0_i32 = arith.constant 0 : i32
    %c0_i32_0 = arith.constant 0 : i32
    %c0_i32_1 = arith.constant 0 : i32
    return %c0_i32, %c0_i32_0 : i32, i32
  }
  func.func @transform_4(%arg0: i32, %arg1: i32) -> (i32, i32) {
    %c0_i32 = arith.constant 0 : i32
    %c0_i32_0 = arith.constant 0 : i32
    %c0_i32_1 = arith.constant 0 : i32
    return %c0_i32, %c0_i32_0 : i32, i32
  }
  func.func @transform_5(%arg0: i32, %arg1: i32) -> (i32, i32) {
    %c0_i32 = arith.constant 0 : i32
    %c0_i32_0 = arith.constant 0 : i32
    return %arg0, %c0_i32 : i32, i32
  }
}

module attributes {stable_mosaic.version = 11 : i64} {
  func.func @_head_kernel(%arg0: i32, %arg1: i32, %arg2: memref<8x8x128xf32, #tpu.memory_space<vmem>>, %arg3: memref<128x128xf32, #tpu.memory_space<vmem>>, %arg4: memref<1x128xf32, #tpu.memory_space<vmem>>, %arg5: memref<128x128xf32, #tpu.memory_space<vmem>>, %arg6: memref<1x128xf32, #tpu.memory_space<vmem>>, %arg7: memref<8x128xf32, #tpu.memory_space<vmem>>, %arg8: memref<8x128xf32, #tpu.memory_space<vmem>>) attributes {dimension_semantics = [#tpu.dimension_semantics<parallel>, #tpu.dimension_semantics<arbitrary>], iteration_bounds = array<i64: 1, 1>, scalar_prefetch = 0 : i64, scratch_operands = 1 : i64, tpu.core_type = #tpu.core_type<tc>, window_params = [{transform_indices = @transform_0, window_bounds = array<i64: 8, 8, 128>}, {pipeline_mode = #tpu.pipeline_mode<synchronous>, transform_indices = @transform_1, window_bounds = array<i64: 128, 128>}, {pipeline_mode = #tpu.pipeline_mode<synchronous>, transform_indices = @transform_2, window_bounds = array<i64: 1, 128>}, {pipeline_mode = #tpu.pipeline_mode<synchronous>, transform_indices = @transform_3, window_bounds = array<i64: 128, 128>}, {pipeline_mode = #tpu.pipeline_mode<synchronous>, transform_indices = @transform_4, window_bounds = array<i64: 1, 128>}, {transform_indices = @transform_5, window_bounds = array<i64: 8, 128>}]} {
    %c0_i32 = arith.constant 0 : i32
    %0 = arith.cmpi eq, %arg1, %c0_i32 : i32
    %1 = arith.extui %0 : i1 to i32
    %c0_i32_0 = arith.constant 0 : i32
    %2 = arith.cmpi ne, %1, %c0_i32_0 : i32
    scf.if %2 {
      %cst_9 = arith.constant 0.000000e+00 : f32
      %11 = vector.broadcast %cst_9 : f32 to vector<8x128xf32>
      %c0_10 = arith.constant 0 : index
      %c0_11 = arith.constant 0 : index
      %12 = vector.load %arg8[%c0_10, %c0_11] : memref<8x128xf32, #tpu.memory_space<vmem>>, vector<8x128xf32>
      tpu.vector_store %arg8[%c0_10, %c0_11], %11 {strides = array<i32>} : memref<8x128xf32, #tpu.memory_space<vmem>>, vector<8x128xf32>,
    } else {
    }
    %c0 = arith.constant 0 : index
    %c0_1 = arith.constant 0 : index
    %3 = vector.load %arg8[%c0, %c0_1] : memref<8x128xf32, #tpu.memory_space<vmem>>, vector<8x128xf32>
    %c0_2 = arith.constant 0 : index
    %c0_3 = arith.constant 0 : index
    %c0_4 = arith.constant 0 : index
    %4 = vector.load %arg2[%c0_2, %c0_3, %c0_4] : memref<8x8x128xf32, #tpu.memory_space<vmem>>, vector<8x8x128xf32>
    %cst = arith.constant dense<0.000000e+00> : vector<8x128xf32>
    %5 = vector.multi_reduction <add>, %4, %cst [1] : vector<8x8x128xf32> to vector<8x128xf32>
    %6 = arith.addf %3, %5 : vector<8x128xf32>
    %c0_5 = arith.constant 0 : index
    %c0_6 = arith.constant 0 : index
    %7 = vector.load %arg8[%c0_5, %c0_6] : memref<8x128xf32, #tpu.memory_space<vmem>>, vector<8x128xf32>
    tpu.vector_store %arg8[%c0_5, %c0_6], %6 {strides = array<i32>} : memref<8x128xf32, #tpu.memory_space<vmem>>, vector<8x128xf32>,
    %c0_i32_7 = arith.constant 0 : i32
    %8 = arith.cmpi eq, %arg1, %c0_i32_7 : i32
    %9 = arith.extui %8 : i1 to i32
    %c0_i32_8 = arith.constant 0 : i32
    %10 = arith.cmpi ne, %9, %c0_i32_8 : i32
    scf.if %10 {
      %c0_9 = arith.constant 0 : index
      %c0_10 = arith.constant 0 : index
      %11 = vector.load %arg8[%c0_9, %c0_10] : memref<8x128xf32, #tpu.memory_space<vmem>>, vector<8x128xf32>
      %cst_11 = arith.constant 1.250000e-01 : f32
      %12 = vector.broadcast %cst_11 : f32 to vector<8x128xf32>
      %13 = arith.mulf %11, %12 : vector<8x128xf32>
      %c0_12 = arith.constant 0 : index
      %c0_13 = arith.constant 0 : index
      %14 = vector.load %arg3[%c0_12, %c0_13] : memref<128x128xf32, #tpu.memory_space<vmem>>, vector<128x128xf32>
      %cst_14 = arith.constant dense<0.000000e+00> : vector<8x128xf32>
      %15 = tpu.matmul %13, %14, %cst_14 {dimension_numbers = #tpu.dot_dimension_numbers<[1], [0], [0], [1], [0, 0, 1, 1], [], []>} : vector<8x128xf32>, vector<128x128xf32>, vector<8x128xf32> -> vector<8x128xf32>
      %c0_15 = arith.constant 0 : index
      %c0_16 = arith.constant 0 : index
      %16 = vector.load %arg4[%c0_15, %c0_16] : memref<1x128xf32, #tpu.memory_space<vmem>>, vector<1x128xf32>
      %17 = vector.broadcast %16 : vector<1x128xf32> to vector<8x128xf32>
      %18 = arith.addf %15, %17 : vector<8x128xf32>
      %19 = math.tanh %18 : vector<8x128xf32>
      %c0_17 = arith.constant 0 : index
      %c0_18 = arith.constant 0 : index
      %20 = vector.load %arg5[%c0_17, %c0_18] : memref<128x128xf32, #tpu.memory_space<vmem>>, vector<128x128xf32>
      %cst_19 = arith.constant dense<0.000000e+00> : vector<8x128xf32>
      %21 = tpu.matmul %19, %20, %cst_19 {dimension_numbers = #tpu.dot_dimension_numbers<[1], [0], [0], [1], [0, 0, 1, 1], [], []>} : vector<8x128xf32>, vector<128x128xf32>, vector<8x128xf32> -> vector<8x128xf32>
      %c0_20 = arith.constant 0 : index
      %c0_21 = arith.constant 0 : index
      %22 = vector.load %arg6[%c0_20, %c0_21] : memref<1x128xf32, #tpu.memory_space<vmem>>, vector<1x128xf32>
      %23 = vector.broadcast %22 : vector<1x128xf32> to vector<8x128xf32>
      %24 = arith.addf %21, %23 : vector<8x128xf32>
      %c0_22 = arith.constant 0 : index
      %c0_23 = arith.constant 0 : index
      %25 = vector.load %arg7[%c0_22, %c0_23] : memref<8x128xf32, #tpu.memory_space<vmem>>, vector<8x128xf32>
      tpu.vector_store %arg7[%c0_22, %c0_23], %24 {strides = array<i32>} : memref<8x128xf32, #tpu.memory_space<vmem>>, vector<8x128xf32>,
    } else {
    }
    return
  }
  func.func @transform_0(%arg0: i32, %arg1: i32) -> (i32, i32, i32) {
    %c0_i32 = arith.constant 0 : i32
    %c0_i32_0 = arith.constant 0 : i32
    return %arg0, %arg1, %c0_i32 : i32, i32, i32
  }
  func.func @transform_1(%arg0: i32, %arg1: i32) -> (i32, i32) {
    %c0_i32 = arith.constant 0 : i32
    %c0_i32_0 = arith.constant 0 : i32
    %c0_i32_1 = arith.constant 0 : i32
    return %c0_i32, %c0_i32_0 : i32, i32
  }
  func.func @transform_2(%arg0: i32, %arg1: i32) -> (i32, i32) {
    %c0_i32 = arith.constant 0 : i32
    %c0_i32_0 = arith.constant 0 : i32
    %c0_i32_1 = arith.constant 0 : i32
    return %c0_i32, %c0_i32_0 : i32, i32
  }
  func.func @transform_3(%arg0: i32, %arg1: i32) -> (i32, i32) {
    %c0_i32 = arith.constant 0 : i32
    %c0_i32_0 = arith.constant 0 : i32
    %c0_i32_1 = arith.constant 0 : i32
    return %c0_i32, %c0_i32_0 : i32, i32
  }
  func.func @transform_4(%arg0: i32, %arg1: i32) -> (i32, i32) {
    %c0_i32 = arith.constant 0 : i32
    %c0_i32_0 = arith.constant 0 : i32
    %c0_i32_1 = arith.constant 0 : i32
    return %c0_i32, %c0_i32_0 : i32, i32
  }
  func.func @transform_5(%arg0: i32, %arg1: i32) -> (i32, i32) {
    %c0_i32 = arith.constant 0 : i32
    %c0_i32_0 = arith.constant 0 : i32
    return %arg0, %c0_i32 : i32, i32
  }
}

</mosaic_0001>

<llo_original>
// kernel: tpu_custom_call.1
$region0: #{tpu_custom_call.1}
  #allocation0 [shape = 'u32[]', space=smem, size = 0x4, offset = 0x4, fixed_abs, tag = 'smem constant byte address 0x4 - core index']
  #allocation1 [shape = 'u32[144,128]{1,0:T(1,128)}', space=vmem, size = 0x12000, scoped, tag = 'internal scratch']
  #allocation2 [shape = 'f32[8,128]{1,0:T(8,128)}', space=vmem, size = 0x1000, scoped, tag = 'scratch operand']
  %s0 = inlined_call_operand.hbm [shape: f32[8,8,128], index: 0, kind: input, shape index: {}]
  %s1 = inlined_call_operand.hbm [shape: f32[128,128], index: 1, kind: input, shape index: {}]
  %s2 = inlined_call_operand.vmem [shape: f32[1,128], index: 2, kind: input, shape index: {}]
  %s3 = inlined_call_operand.hbm [shape: f32[128,128], index: 3, kind: input, shape index: {}]
  %s4 = inlined_call_operand.vmem [shape: f32[1,128], index: 4, kind: input, shape index: {}]
  %s5 = inlined_call_operand.hbm [shape: f32[8,128], index: 5, kind: output, shape index: {}]
  %s6 = sld [smem:[#allocation0]]
  $region50: #{tpu_custom_call.1} parent=0
    _
  %s8 = ssub.s32 1, %s6
  %s9 = scalar_select 0, %s8, %s6
  $region1: #{tpu_custom_call.1} parent=0
    #allocation3 [shape = 'u8[32768]{0}', space=vmem, size = 0x8000, scoped, tag = 'input window, operand 0, single buffered']
    #allocation4 [shape = 's32[1]{0}', space=sflag, size = 0x4, scoped, tag = 'scoped memory for tpu_custom_call.1']
    #allocation5 [shape = 's32[1]{0}', space=sflag, size = 0x4, scoped, tag = 'scoped memory for tpu_custom_call.1']
    #allocation6 [shape = 'u8[65536]{0}', space=vmem, size = 0x10000, scoped, tag = 'input window, operand 1, single buffered']
    #allocation7 [shape = 's32[1]{0}', space=sflag, size = 0x4, scoped, tag = 'scoped memory for tpu_custom_call.1']
    #allocation8 [shape = 'u8[65536]{0}', space=vmem, size = 0x10000, scoped, tag = 'input window, operand 3, single buffered']
    #allocation9 [shape = 'u8[4096]{0}', space=vmem, size = 0x1000, scoped, tag = 'output window, operand 0, single buffered']
    %10 = vsyncpa [#allocation4], 0
    %11 = vsyncpa [#allocation7], 0
    %12 = vsyncpa [#allocation5], 0
    // Predicated region
    $region2: #{tpu_custom_call.1} parent=1 // pred_check
      _
    $region3: #{tpu_custom_call.1} parent=1 // pred_check_branch
      %14 = sbr.rel (0) target = $region5
    $region4: #{tpu_custom_call.1} parent=1 // pred_region
      %s16 = ssub.s32 1024, 1024
      %17 = vsyncadd [#allocation4], %s16
      %s18 = sshll.u32 [#allocation3], 4
      %s19 = int_to_ptr.vmem [resolvable:$true] %s18
      %24 = dma.hbm_to_vmem [thread:$0]  %s0, 1024, %s19, [#allocation4], 128, 128, 8
    $region5: #{tpu_custom_call.1} parent=1 // pred_fallthru
      _
    // Predicated region
    $region6: #{tpu_custom_call.1} parent=1 // pred_check
      _
    $region7: #{tpu_custom_call.1} parent=1 // pred_check_branch
      %26 = sbr.rel (0) target = $region9
    $region8: #{tpu_custom_call.1} parent=1 // pred_region
      %s28 = ssub.s32 2048, 2048
      %29 = vsyncadd [#allocation7], %s28
      %s30 = sshll.u32 [#allocation6], 4
      %s31 = int_to_ptr.vmem [resolvable:$true] %s30
      %36 = dma.hbm_to_vmem [thread:$0]  %s1, 2048, %s31, [#allocation7], 128, 128, 8
    $region9: #{tpu_custom_call.1} parent=1 // pred_fallthru
      _
    // Predicated region
    $region10: #{tpu_custom_call.1} parent=1 // pred_check
      _
    $region11: #{tpu_custom_call.1} parent=1 // pred_check_branch
      %38 = sbr.rel (0) target = $region13
    $region12: #{tpu_custom_call.1} parent=1 // pred_region
      _
    $region13: #{tpu_custom_call.1} parent=1 // pred_fallthru
      _
    // Predicated region
    $region14: #{tpu_custom_call.1} parent=1 // pred_check
      _
    $region15: #{tpu_custom_call.1} parent=1 // pred_check_branch
      %40 = sbr.rel (0) target = $region17
    $region16: #{tpu_custom_call.1} parent=1 // pred_region
      %s42 = ssub.s32 2048, 2048
      %43 = vsyncadd [#allocation7], %s42
      %s44 = sshll.u32 [#allocation8], 4
      %s45 = int_to_ptr.vmem [resolvable:$true] %s44
      %50 = dma.hbm_to_vmem [thread:$0]  %s3, 2048, %s45, [#allocation7], 128, 128, 8
    $region17: #{tpu_custom_call.1} parent=1 // pred_fallthru
      _
    // Predicated region
    $region18: #{tpu_custom_call.1} parent=1 // pred_check
      _
    $region19: #{tpu_custom_call.1} parent=1 // pred_check_branch
      %52 = sbr.rel (0) target = $region21
    $region20: #{tpu_custom_call.1} parent=1 // pred_region
      _
    $region21: #{tpu_custom_call.1} parent=1 // pred_fallthru
      _
    // Predicated region
    $region22: #{tpu_custom_call.1} parent=1 // pred_check
      _
    $region23: #{tpu_custom_call.1} parent=1 // pred_check_branch
      %54 = sbr.rel (0) target = $region25
    $region24: #{tpu_custom_call.1} parent=1 // pred_region
      %55 = dma.done [#allocation4], 1024
    $region25: #{tpu_custom_call.1} parent=1 // pred_fallthru
      _
    // Predicated region
    $region26: #{tpu_custom_call.1} parent=1 // pred_check
      _
    $region27: #{tpu_custom_call.1} parent=1 // pred_check_branch
      %57 = sbr.rel (0) target = $region29
    $region28: #{tpu_custom_call.1} parent=1 // pred_region
      %58 = dma.done [#allocation7], 2048
    $region29: #{tpu_custom_call.1} parent=1 // pred_fallthru
      _
    // Predicated region
    $region30: #{tpu_custom_call.1} parent=1 // pred_check
      _
    $region31: #{tpu_custom_call.1} parent=1 // pred_check_branch
      %60 = sbr.rel (0) target = $region33
    $region32: #{tpu_custom_call.1} parent=1 // pred_region
      %61 = dma.done [#allocation7], 2048
    $region33: #{tpu_custom_call.1} parent=1 // pred_fallthru
      _
    %p62 = scmp.eq.s32.totalorder 0, 0
    // Predicated region
    $region34: #{tpu_custom_call.1} parent=1 // pred_check
      %p63 = pneg %p62
    $region35: #{tpu_custom_call.1} parent=1 // pred_check_branch
      %65 = sbr.rel (%p63) target = $region37
    $region36: #{tpu_custom_call.1} parent=1 // pred_region
      %66 = vst [vmem:[#allocation2] sm:$0xff] 0.0
    $region37: #{tpu_custom_call.1} parent=1 // pred_fallthru
      _
    %v67 = vld [vmem:[#allocation2] sm:$0xff]
    %v68 = vld [vmem:[#allocation3] sm:$0xff]
    %v69 = vld [vmem:[#allocation3 + $0x8] sm:$0xff]
    %v70 = vld [vmem:[#allocation3 + $0x10] sm:$0xff]
    %v71 = vld [vmem:[#allocation3 + $0x18] sm:$0xff]
    %v72 = vld [vmem:[#allocation3 + $0x20] sm:$0xff]
    %v73 = vld [vmem:[#allocation3 + $0x28] sm:$0xff]
    %v74 = vld [vmem:[#allocation3 + $0x30] sm:$0xff]
    %v75 = vld [vmem:[#allocation3 + $0x38] sm:$0xff]
    %v76 = vrot.slane %v68, 4
    %v77 = vadd.f32 %v68, %v76
    %v78 = vrot.slane %v77, 2
    %v79 = vadd.f32 %v77, %v78
    %v80 = vrot.slane %v79, 1
    %v81 = vadd.f32 %v79, %v80
    %v82 = vrot.slane %v69, 4
    %v83 = vadd.f32 %v69, %v82
    %v84 = vrot.slane %v83, 2
    %v85 = vadd.f32 %v83, %v84
    %v86 = vrot.slane %v85, 1
    %v87 = vadd.f32 %v85, %v86
    %v88 = vrot.slane %v70, 4
    %v89 = vadd.f32 %v70, %v88
    %v90 = vrot.slane %v89, 2
    %v91 = vadd.f32 %v89, %v90
    %v92 = vrot.slane %v91, 1
    %v93 = vadd.f32 %v91, %v92
    %v94 = vrot.slane %v71, 4
    %v95 = vadd.f32 %v71, %v94
    %v96 = vrot.slane %v95, 2
    %v97 = vadd.f32 %v95, %v96
    %v98 = vrot.slane %v97, 1
    %v99 = vadd.f32 %v97, %v98
    %v100 = vrot.slane %v72, 4
    %v101 = vadd.f32 %v72, %v100
    %v102 = vrot.slane %v101, 2
    %v103 = vadd.f32 %v101, %v102
    %v104 = vrot.slane %v103, 1
    %v105 = vadd.f32 %v103, %v104
    %v106 = vrot.slane %v73, 4
    %v107 = vadd.f32 %v73, %v106
    %v108 = vrot.slane %v107, 2
    %v109 = vadd.f32 %v107, %v108
    %v110 = vrot.slane %v109, 1
    %v111 = vadd.f32 %v109, %v110
    %v112 = vrot.slane %v74, 4
    %v113 = vadd.f32 %v74, %v112
    %v114 = vrot.slane %v113, 2
    %v115 = vadd.f32 %v113, %v114
    %v116 = vrot.slane %v115, 1
    %v117 = vadd.f32 %v115, %v116
    %v118 = vrot.slane %v75, 4
    %v119 = vadd.f32 %v75, %v118
    %v120 = vrot.slane %v119, 2
    %v121 = vadd.f32 %v119, %v120
    %v122 = vrot.slane %v121, 1
    %v123 = vadd.f32 %v121, %v122
    %vm132 = vcmask 1041409
    %v133 = vsel %vm132, %v87, %v81
    %vm134 = vcmask 1042434
    %v135 = vsel %vm134, %v93, %v133
    %vm136 = vcmask 1043459
    %v137 = vsel %vm136, %v99, %v135
    %vm138 = vcmask 1044484
    %v139 = vsel %vm138, %v105, %v137
    %vm140 = vcmask 1045509
    %v141 = vsel %vm140, %v111, %v139
    %vm142 = vcmask 1046534
    %v143 = vsel %vm142, %v117, %v141
    %vm144 = vcmask 1047559
    %v145 = vsel %vm144, %v123, %v143
    %v147 = vadd.f32 %v67, %v145
    %148 = vst [vmem:[#allocation2] sm:$0xff] %v147
    // Predicated region
    $region38: #{tpu_custom_call.1} parent=1 // pred_check
      %p149 = pneg %p62
    $region39: #{tpu_custom_call.1} parent=1 // pred_check_branch
      %151 = sbr.rel (%p149) target = $region41
    $region40: #{tpu_custom_call.1} parent=1 // pred_region
      %v152 = vld [vmem:[#allocation2] sm:$0xff]
      %v153 = vmul.f32 %v152, 0.125
      %v154 = vld [vmem:[#allocation6] sm:$0xff]
      %v155 = vld [vmem:[#allocation6 + $0x8] sm:$0xff]
      %v156 = vld [vmem:[#allocation6 + $0x10] sm:$0xff]
      %v157 = vld [vmem:[#allocation6 + $0x18] sm:$0xff]
      %v158 = vld [vmem:[#allocation6 + $0x20] sm:$0xff]
      %v159 = vld [vmem:[#allocation6 + $0x28] sm:$0xff]
      %v160 = vld [vmem:[#allocation6 + $0x30] sm:$0xff]
      %v161 = vld [vmem:[#allocation6 + $0x38] sm:$0xff]
      %v162 = vld [vmem:[#allocation6 + $0x40] sm:$0xff]
      %v163 = vld [vmem:[#allocation6 + $0x48] sm:$0xff]
      %v164 = vld [vmem:[#allocation6 + $0x50] sm:$0xff]
      %v165 = vld [vmem:[#allocation6 + $0x58] sm:$0xff]
      %v166 = vld [vmem:[#allocation6 + $0x60] sm:$0xff]
      %v167 = vld [vmem:[#allocation6 + $0x68] sm:$0xff]
      %v168 = vld [vmem:[#allocation6 + $0x70] sm:$0xff]
      %v169 = vld [vmem:[#allocation6 + $0x78] sm:$0xff]
      %v170 = vld [vmem:[%s2] sm:$0x1]
      %v172 = vlaneseq
      %v173 = vshrl.u32 %v172, 7
      %v174 = vsub.s32 0, %v173
      %v175 = vrot.slane %v170, %v174
      %177 = vmatprep.subr.mxu0 0.0
      %178 = vmatpush1.msra.mxu0 %v154
      %179 = vmatprep.subr.mxu0 0.0
      %180 = vmatpush1.msra.mxu0 %v155
      %181 = vmatprep.subr.mxu0 0.0
      %182 = vmatpush1.msra.mxu0 %v156
      %183 = vmatprep.subr.mxu0 0.0
      %184 = vmatpush1.msra.mxu0 %v157
      %185 = vmatprep.subr.mxu0 0.0
      %186 = vmatpush1.msra.mxu0 %v158
      %187 = vmatprep.subr.mxu0 0.0
      %188 = vmatpush1.msra.mxu0 %v159
      %189 = vmatprep.subr.mxu0 0.0
      %190 = vmatpush1.msra.mxu0 %v160
      %191 = vmatprep.subr.mxu0 0.0
      %192 = vmatpush1.msra.mxu0 %v161
      %193 = vmatprep.subr.mxu0 0.0
      %194 = vmatpush1.msra.mxu0 %v162
      %195 = vmatprep.subr.mxu0 0.0
      %196 = vmatpush1.msra.mxu0 %v163
      %197 = vmatprep.subr.mxu0 0.0
      %198 = vmatpush1.msra.mxu0 %v164
      %199 = vmatprep.subr.mxu0 0.0
      %200 = vmatpush1.msra.mxu0 %v165
      %201 = vmatprep.subr.mxu0 0.0
      %202 = vmatpush1.msra.mxu0 %v166
      %203 = vmatprep.subr.mxu0 0.0
      %204 = vmatpush1.msra.mxu0 %v167
      %205 = vmatprep.subr.mxu0 0.0
      %206 = vmatpush1.msra.mxu0 %v168
      %207 = vmatprep.subr.mxu0 0.0
      %208 = vmatpush1.msra.mxu0 %v169
      %209 = vmatprep.subr.mxu0 0.0
      %210 = vmatpush1.msra.mxu0 0.0
      %211 = vmatprep.subr.mxu0 0.0
      %212 = vmatpush1.msra.mxu0 0.0
      %213 = vmatprep.subr.mxu0 0.0
      %214 = vmatpush1.msra.mxu0 0.0
      %215 = vmatprep.subr.mxu0 0.0
      %216 = vmatpush1.msra.mxu0 0.0
      %217 = vmatprep.subr.mxu0 0.0
      %218 = vmatpush1.msra.mxu0 0.0
      %219 = vmatprep.subr.mxu0 0.0
      %220 = vmatpush1.msra.mxu0 0.0
      %221 = vmatprep.subr.mxu0 0.0
      %222 = vmatpush1.msra.mxu0 0.0
      %223 = vmatprep.subr.mxu0 0.0
      %224 = vmatpush1.msra.mxu0 0.0
      %225 = vmatprep.subr.mxu0 0.0
      %226 = vmatpush1.msra.mxu0 0.0
      %227 = vmatprep.subr.mxu0 0.0
      %228 = vmatpush1.msra.mxu0 0.0
      %229 = vmatprep.subr.mxu0 0.0
      %230 = vmatpush1.msra.mxu0 0.0
      %231 = vmatprep.subr.mxu0 0.0
      %232 = vmatpush1.msra.mxu0 0.0
      %233 = vmatprep.subr.mxu0 0.0
      %234 = vmatpush1.msra.mxu0 0.0
      %235 = vmatprep.subr.mxu0 0.0
      %236 = vmatpush1.msra.mxu0 0.0
      %237 = vmatprep.subr.mxu0 0.0
      %238 = vmatpush1.msra.mxu0 0.0
      %239 = vmatprep.subr.mxu0 0.0
      %240 = vmatpush1.msra.mxu0 0.0
      %241 = vmatprep.mubr.f32.mxu0 0.0
      %242 = vmatmul.mubr.f32.gmra.mrb[0].mxu0 %v153
      %v243 = vpop.f32.mrb[0].mxu0
      %v244 = vadd.f32 %v175, %v243
      %v245 = vpop.f32.mrb[0].mxu0
      %246 = vdwg.mxu0
      %v247 = vtanh.pop %v244
      %v248 = vld [vmem:[#allocation8] sm:$0xff]
      %v249 = vld [vmem:[#allocation8 + $0x8] sm:$0xff]
      %v250 = vld [vmem:[#allocation8 + $0x10] sm:$0xff]
      %v251 = vld [vmem:[#allocation8 + $0x18] sm:$0xff]
      %v252 = vld [vmem:[#allocation8 + $0x20] sm:$0xff]
      %v253 = vld [vmem:[#allocation8 + $0x28] sm:$0xff]
      %v254 = vld [vmem:[#allocation8 + $0x30] sm:$0xff]
      %v255 = vld [vmem:[#allocation8 + $0x38] sm:$0xff]
      %v256 = vld [vmem:[#allocation8 + $0x40] sm:$0xff]
      %v257 = vld [vmem:[#allocation8 + $0x48] sm:$0xff]
      %v258 = vld [vmem:[#allocation8 + $0x50] sm:$0xff]
      %v259 = vld [vmem:[#allocation8 + $0x58] sm:$0xff]
      %v260 = vld [vmem:[#allocation8 + $0x60] sm:$0xff]
      %v261 = vld [vmem:[#allocation8 + $0x68] sm:$0xff]
      %v262 = vld [vmem:[#allocation8 + $0x70] sm:$0xff]
      %v263 = vld [vmem:[#allocation8 + $0x78] sm:$0xff]
      %v264 = vld [vmem:[%s4] sm:$0x1]
      %v266 = vlaneseq
      %v267 = vshrl.u32 %v266, 7
      %v268 = vsub.s32 0, %v267
      %v269 = vrot.slane %v264, %v268
      %271 = vmatprep.subr.mxu0 0.0
      %272 = vmatpush1.msra.mxu0 %v248
      %273 = vmatprep.subr.mxu0 0.0
      %274 = vmatpush1.msra.mxu0 %v249
      %275 = vmatprep.subr.mxu0 0.0
      %276 = vmatpush1.msra.mxu0 %v250
      %277 = vmatprep.subr.mxu0 0.0
      %278 = vmatpush1.msra.mxu0 %v251
      %279 = vmatprep.subr.mxu0 0.0
      %280 = vmatpush1.msra.mxu0 %v252
      %281 = vmatprep.subr.mxu0 0.0
      %282 = vmatpush1.msra.mxu0 %v253
      %283 = vmatprep.subr.mxu0 0.0
      %284 = vmatpush1.msra.mxu0 %v254
      %285 = vmatprep.subr.mxu0 0.0
      %286 = vmatpush1.msra.mxu0 %v255
      %287 = vmatprep.subr.mxu0 0.0
      %288 = vmatpush1.msra.mxu0 %v256
      %289 = vmatprep.subr.mxu0 0.0
      %290 = vmatpush1.msra.mxu0 %v257
      %291 = vmatprep.subr.mxu0 0.0
      %292 = vmatpush1.msra.mxu0 %v258
      %293 = vmatprep.subr.mxu0 0.0
      %294 = vmatpush1.msra.mxu0 %v259
      %295 = vmatprep.subr.mxu0 0.0
      %296 = vmatpush1.msra.mxu0 %v260
      %297 = vmatprep.subr.mxu0 0.0
      %298 = vmatpush1.msra.mxu0 %v261
      %299 = vmatprep.subr.mxu0 0.0
      %300 = vmatpush1.msra.mxu0 %v262
      %301 = vmatprep.subr.mxu0 0.0
      %302 = vmatpush1.msra.mxu0 %v263
      %303 = vmatprep.subr.mxu0 0.0
      %304 = vmatpush1.msra.mxu0 0.0
      %305 = vmatprep.subr.mxu0 0.0
      %306 = vmatpush1.msra.mxu0 0.0
      %307 = vmatprep.subr.mxu0 0.0
      %308 = vmatpush1.msra.mxu0 0.0
      %309 = vmatprep.subr.mxu0 0.0
      %310 = vmatpush1.msra.mxu0 0.0
      %311 = vmatprep.subr.mxu0 0.0
      %312 = vmatpush1.msra.mxu0 0.0
      %313 = vmatprep.subr.mxu0 0.0
      %314 = vmatpush1.msra.mxu0 0.0
      %315 = vmatprep.subr.mxu0 0.0
      %316 = vmatpush1.msra.mxu0 0.0
      %317 = vmatprep.subr.mxu0 0.0
      %318 = vmatpush1.msra.mxu0 0.0
      %319 = vmatprep.subr.mxu0 0.0
      %320 = vmatpush1.msra.mxu0 0.0
      %321 = vmatprep.subr.mxu0 0.0
      %322 = vmatpush1.msra.mxu0 0.0
      %323 = vmatprep.subr.mxu0 0.0
      %324 = vmatpush1.msra.mxu0 0.0
      %325 = vmatprep.subr.mxu0 0.0
      %326 = vmatpush1.msra.mxu0 0.0
      %327 = vmatprep.subr.mxu0 0.0
      %328 = vmatpush1.msra.mxu0 0.0
      %329 = vmatprep.subr.mxu0 0.0
      %330 = vmatpush1.msra.mxu0 0.0
      %331 = vmatprep.subr.mxu0 0.0
      %332 = vmatpush1.msra.mxu0 0.0
      %333 = vmatprep.subr.mxu0 0.0
      %334 = vmatpush1.msra.mxu0 0.0
      %335 = vmatprep.mubr.f32.mxu0 0.0
      %336 = vmatmul.mubr.f32.gmra.mrb[0].mxu0 %v247
      %v337 = vpop.f32.mrb[0].mxu0
      %v338 = vadd.f32 %v269, %v337
      %v339 = vpop.f32.mrb[0].mxu0
      %340 = vdwg.mxu0
      %341 = vst [vmem:[#allocation9] sm:$0xff] %v338
    $region41: #{tpu_custom_call.1} parent=1 // pred_fallthru
      _
    // Predicated region
    $region42: #{tpu_custom_call.1} parent=1 // pred_check
      _
    $region43: #{tpu_custom_call.1} parent=1 // pred_check_branch
      %343 = sbr.rel (0) target = $region45
    $region44: #{tpu_custom_call.1} parent=1 // pred_region
      %s345 = ssub.s32 128, 128
      %346 = vsyncadd [#allocation5], %s345
      %s348 = sshll.u32 [#allocation9], 4
      %s349 = int_to_ptr.vmem [resolvable:$true] %s348
      %351 = dma.vmem_to_hbm [thread:$0]  %s349, 128, %s5, [#allocation5]
    $region45: #{tpu_custom_call.1} parent=1 // pred_fallthru
      _
    // Predicated region
    $region46: #{tpu_custom_call.1} parent=1 // pred_check
      _
    $region47: #{tpu_custom_call.1} parent=1 // pred_check_branch
      %353 = sbr.rel (0) target = $region49
    $region48: #{tpu_custom_call.1} parent=1 // pred_region
      %354 = dma.done [#allocation5], 128
    $region49: #{tpu_custom_call.1} parent=1 // pred_fallthru
      _
    %355 = vsyncpa [#allocation4], 1
    %356 = vsyncpa [#allocation7], 1
    %357 = vsyncpa [#allocation5], 1

// kernel: tpu_custom_call.1
$region0: #{tpu_custom_call.1}
  #allocation0 [shape = 'u32[]', space=smem, size = 0x4, offset = 0x4, fixed_abs, tag = 'smem constant byte address 0x4 - core index']
  #allocation1 [shape = 'u32[144,128]{1,0:T(1,128)}', space=vmem, size = 0x12000, scoped, tag = 'internal scratch']
  #allocation2 [shape = 'f32[8,128]{1,0:T(8,128)}', space=vmem, size = 0x1000, scoped, tag = 'scratch operand']
  %s0 = inlined_call_operand.hbm [shape: f32[8,8,128], index: 0, kind: input, shape index: {}]
  %s1 = inlined_call_operand.hbm [shape: f32[128,128], index: 1, kind: input, shape index: {}]
  %s2 = inlined_call_operand.vmem [shape: f32[1,128], index: 2, kind: input, shape index: {}]
  %s3 = inlined_call_operand.hbm [shape: f32[128,128], index: 3, kind: input, shape index: {}]
  %s4 = inlined_call_operand.vmem [shape: f32[1,128], index: 4, kind: input, shape index: {}]
  %s5 = inlined_call_operand.hbm [shape: f32[8,128], index: 5, kind: output, shape index: {}]
  %s6 = sld [smem:[#allocation0]]
  $region50: #{tpu_custom_call.1} parent=0
    _
  %s8 = ssub.s32 1, %s6
  %s9 = scalar_select 0, %s8, %s6
  $region1: #{tpu_custom_call.1} parent=0
    #allocation3 [shape = 'u8[32768]{0}', space=vmem, size = 0x8000, scoped, tag = 'input window, operand 0, single buffered']
    #allocation4 [shape = 's32[1]{0}', space=sflag, size = 0x4, scoped, tag = 'scoped memory for tpu_custom_call.1']
    #allocation5 [shape = 's32[1]{0}', space=sflag, size = 0x4, scoped, tag = 'scoped memory for tpu_custom_call.1']
    #allocation6 [shape = 'u8[65536]{0}', space=vmem, size = 0x10000, scoped, tag = 'input window, operand 1, single buffered']
    #allocation7 [shape = 's32[1]{0}', space=sflag, size = 0x4, scoped, tag = 'scoped memory for tpu_custom_call.1']
    #allocation8 [shape = 'u8[65536]{0}', space=vmem, size = 0x10000, scoped, tag = 'input window, operand 3, single buffered']
    #allocation9 [shape = 'u8[4096]{0}', space=vmem, size = 0x1000, scoped, tag = 'output window, operand 0, single buffered']
    %10 = vsyncpa [#allocation4], 0
    %11 = vsyncpa [#allocation7], 0
    %12 = vsyncpa [#allocation5], 0
    // Predicated region
    $region2: #{tpu_custom_call.1} parent=1 // pred_check
      _
    $region3: #{tpu_custom_call.1} parent=1 // pred_check_branch
      %14 = sbr.rel (0) target = $region5
    $region4: #{tpu_custom_call.1} parent=1 // pred_region
      %s16 = ssub.s32 1024, 1024
      %17 = vsyncadd [#allocation4], %s16
      %s18 = sshll.u32 [#allocation3], 4
      %s19 = int_to_ptr.vmem [resolvable:$true] %s18
      %24 = dma.hbm_to_vmem [thread:$0]  %s0, 1024, %s19, [#allocation4], 128, 128, 8
    $region5: #{tpu_custom_call.1} parent=1 // pred_fallthru
      _
    // Predicated region
    $region6: #{tpu_custom_call.1} parent=1 // pred_check
      _
    $region7: #{tpu_custom_call.1} parent=1 // pred_check_branch
      %26 = sbr.rel (0) target = $region9
    $region8: #{tpu_custom_call.1} parent=1 // pred_region
      %s28 = ssub.s32 2048, 2048
      %29 = vsyncadd [#allocation7], %s28
      %s30 = sshll.u32 [#allocation6], 4
      %s31 = int_to_ptr.vmem [resolvable:$true] %s30
      %36 = dma.hbm_to_vmem [thread:$0]  %s1, 2048, %s31, [#allocation7], 128, 128, 8
    $region9: #{tpu_custom_call.1} parent=1 // pred_fallthru
      _
    // Predicated region
    $region10: #{tpu_custom_call.1} parent=1 // pred_check
      _
    $region11: #{tpu_custom_call.1} parent=1 // pred_check_branch
      %38 = sbr.rel (0) target = $region13
    $region12: #{tpu_custom_call.1} parent=1 // pred_region
      _
    $region13: #{tpu_custom_call.1} parent=1 // pred_fallthru
      _
    // Predicated region
    $region14: #{tpu_custom_call.1} parent=1 // pred_check
      _
    $region15: #{tpu_custom_call.1} parent=1 // pred_check_branch
      %40 = sbr.rel (0) target = $region17
    $region16: #{tpu_custom_call.1} parent=1 // pred_region
      %s42 = ssub.s32 2048, 2048
      %43 = vsyncadd [#allocation7], %s42
      %s44 = sshll.u32 [#allocation8], 4
      %s45 = int_to_ptr.vmem [resolvable:$true] %s44
      %50 = dma.hbm_to_vmem [thread:$0]  %s3, 2048, %s45, [#allocation7], 128, 128, 8
    $region17: #{tpu_custom_call.1} parent=1 // pred_fallthru
      _
    // Predicated region
    $region18: #{tpu_custom_call.1} parent=1 // pred_check
      _
    $region19: #{tpu_custom_call.1} parent=1 // pred_check_branch
      %52 = sbr.rel (0) target = $region21
    $region20: #{tpu_custom_call.1} parent=1 // pred_region
      _
    $region21: #{tpu_custom_call.1} parent=1 // pred_fallthru
      _
    // Predicated region
    $region22: #{tpu_custom_call.1} parent=1 // pred_check
      _
    $region23: #{tpu_custom_call.1} parent=1 // pred_check_branch
      %54 = sbr.rel (0) target = $region25
    $region24: #{tpu_custom_call.1} parent=1 // pred_region
      %55 = dma.done [#allocation4], 1024
    $region25: #{tpu_custom_call.1} parent=1 // pred_fallthru
      _
    // Predicated region
    $region26: #{tpu_custom_call.1} parent=1 // pred_check
      _
    $region27: #{tpu_custom_call.1} parent=1 // pred_check_branch
      %57 = sbr.rel (0) target = $region29
    $region28: #{tpu_custom_call.1} parent=1 // pred_region
      %58 = dma.done [#allocation7], 2048
    $region29: #{tpu_custom_call.1} parent=1 // pred_fallthru
      _
    // Predicated region
    $region30: #{tpu_custom_call.1} parent=1 // pred_check
      _
    $region31: #{tpu_custom_call.1} parent=1 // pred_check_branch
      %60 = sbr.rel (0) target = $region33
    $region32: #{tpu_custom_call.1} parent=1 // pred_region
      %61 = dma.done [#allocation7], 2048
    $region33: #{tpu_custom_call.1} parent=1 // pred_fallthru
      _
    %p62 = scmp.eq.s32.totalorder 0, 0
    // Predicated region
    $region34: #{tpu_custom_call.1} parent=1 // pred_check
      %p63 = pneg %p62
    $region35: #{tpu_custom_call.1} parent=1 // pred_check_branch
      %65 = sbr.rel (%p63) target = $region37
    $region36: #{tpu_custom_call.1} parent=1 // pred_region
      %66 = vst [vmem:[#allocation2] sm:$0xff] 0.0
    $region37: #{tpu_custom_call.1} parent=1 // pred_fallthru
      _
    %v67 = vld [vmem:[#allocation2] sm:$0xff]
    %v68 = vld [vmem:[#allocation3] sm:$0xff]
    %v69 = vld [vmem:[#allocation3 + $0x8] sm:$0xff]
    %v70 = vld [vmem:[#allocation3 + $0x10] sm:$0xff]
    %v71 = vld [vmem:[#allocation3 + $0x18] sm:$0xff]
    %v72 = vld [vmem:[#allocation3 + $0x20] sm:$0xff]
    %v73 = vld [vmem:[#allocation3 + $0x28] sm:$0xff]
    %v74 = vld [vmem:[#allocation3 + $0x30] sm:$0xff]
    %v75 = vld [vmem:[#allocation3 + $0x38] sm:$0xff]
    %v76 = vrot.slane %v68, 4
    %v77 = vadd.f32 %v68, %v76
    %v78 = vrot.slane %v77, 2
    %v79 = vadd.f32 %v77, %v78
    %v80 = vrot.slane %v79, 1
    %v81 = vadd.f32 %v79, %v80
    %v82 = vrot.slane %v69, 4
    %v83 = vadd.f32 %v69, %v82
    %v84 = vrot.slane %v83, 2
    %v85 = vadd.f32 %v83, %v84
    %v86 = vrot.slane %v85, 1
    %v87 = vadd.f32 %v85, %v86
    %v88 = vrot.slane %v70, 4
    %v89 = vadd.f32 %v70, %v88
    %v90 = vrot.slane %v89, 2
    %v91 = vadd.f32 %v89, %v90
    %v92 = vrot.slane %v91, 1
    %v93 = vadd.f32 %v91, %v92
    %v94 = vrot.slane %v71, 4
    %v95 = vadd.f32 %v71, %v94
    %v96 = vrot.slane %v95, 2
    %v97 = vadd.f32 %v95, %v96
    %v98 = vrot.slane %v97, 1
    %v99 = vadd.f32 %v97, %v98
    %v100 = vrot.slane %v72, 4
    %v101 = vadd.f32 %v72, %v100
    %v102 = vrot.slane %v101, 2
    %v103 = vadd.f32 %v101, %v102
    %v104 = vrot.slane %v103, 1
    %v105 = vadd.f32 %v103, %v104
    %v106 = vrot.slane %v73, 4
    %v107 = vadd.f32 %v73, %v106
    %v108 = vrot.slane %v107, 2
    %v109 = vadd.f32 %v107, %v108
    %v110 = vrot.slane %v109, 1
    %v111 = vadd.f32 %v109, %v110
    %v112 = vrot.slane %v74, 4
    %v113 = vadd.f32 %v74, %v112
    %v114 = vrot.slane %v113, 2
    %v115 = vadd.f32 %v113, %v114
    %v116 = vrot.slane %v115, 1
    %v117 = vadd.f32 %v115, %v116
    %v118 = vrot.slane %v75, 4
    %v119 = vadd.f32 %v75, %v118
    %v120 = vrot.slane %v119, 2
    %v121 = vadd.f32 %v119, %v120
    %v122 = vrot.slane %v121, 1
    %v123 = vadd.f32 %v121, %v122
    %vm132 = vcmask 1041409
    %v133 = vsel %vm132, %v87, %v81
    %vm134 = vcmask 1042434
    %v135 = vsel %vm134, %v93, %v133
    %vm136 = vcmask 1043459
    %v137 = vsel %vm136, %v99, %v135
    %vm138 = vcmask 1044484
    %v139 = vsel %vm138, %v105, %v137
    %vm140 = vcmask 1045509
    %v141 = vsel %vm140, %v111, %v139
    %vm142 = vcmask 1046534
    %v143 = vsel %vm142, %v117, %v141
    %vm144 = vcmask 1047559
    %v145 = vsel %vm144, %v123, %v143
    %v147 = vadd.f32 %v67, %v145
    %148 = vst [vmem:[#allocation2] sm:$0xff] %v147
    // Predicated region
    $region38: #{tpu_custom_call.1} parent=1 // pred_check
      %p149 = pneg %p62
    $region39: #{tpu_custom_call.1} parent=1 // pred_check_branch
      %151 = sbr.rel (%p149) target = $region41
    $region40: #{tpu_custom_call.1} parent=1 // pred_region
      %v152 = vld [vmem:[#allocation2] sm:$0xff]
      %v153 = vmul.f32 %v152, 0.125
      %v154 = vld [vmem:[#allocation6] sm:$0xff]
      %v155 = vld [vmem:[#allocation6 + $0x8] sm:$0xff]
      %v156 = vld [vmem:[#allocation6 + $0x10] sm:$0xff]
      %v157 = vld [vmem:[#allocation6 + $0x18] sm:$0xff]
      %v158 = vld [vmem:[#allocation6 + $0x20] sm:$0xff]
      %v159 = vld [vmem:[#allocation6 + $0x28] sm:$0xff]
      %v160 = vld [vmem:[#allocation6 + $0x30] sm:$0xff]
      %v161 = vld [vmem:[#allocation6 + $0x38] sm:$0xff]
      %v162 = vld [vmem:[#allocation6 + $0x40] sm:$0xff]
      %v163 = vld [vmem:[#allocation6 + $0x48] sm:$0xff]
      %v164 = vld [vmem:[#allocation6 + $0x50] sm:$0xff]
      %v165 = vld [vmem:[#allocation6 + $0x58] sm:$0xff]
      %v166 = vld [vmem:[#allocation6 + $0x60] sm:$0xff]
      %v167 = vld [vmem:[#allocation6 + $0x68] sm:$0xff]
      %v168 = vld [vmem:[#allocation6 + $0x70] sm:$0xff]
      %v169 = vld [vmem:[#allocation6 + $0x78] sm:$0xff]
      %v170 = vld [vmem:[%s2] sm:$0x1]
      %v172 = vlaneseq
      %v173 = vshrl.u32 %v172, 7
      %v174 = vsub.s32 0, %v173
      %v175 = vrot.slane %v170, %v174
      %177 = vmatprep.subr.mxu0 0.0
      %178 = vmatpush1.msra.mxu0 %v154
      %179 = vmatprep.subr.mxu0 0.0
      %180 = vmatpush1.msra.mxu0 %v155
      %181 = vmatprep.subr.mxu0 0.0
      %182 = vmatpush1.msra.mxu0 %v156
      %183 = vmatprep.subr.mxu0 0.0
      %184 = vmatpush1.msra.mxu0 %v157
      %185 = vmatprep.subr.mxu0 0.0
      %186 = vmatpush1.msra.mxu0 %v158
      %187 = vmatprep.subr.mxu0 0.0
      %188 = vmatpush1.msra.mxu0 %v159
      %189 = vmatprep.subr.mxu0 0.0
      %190 = vmatpush1.msra.mxu0 %v160
      %191 = vmatprep.subr.mxu0 0.0
      %192 = vmatpush1.msra.mxu0 %v161
      %193 = vmatprep.subr.mxu0 0.0
      %194 = vmatpush1.msra.mxu0 %v162
      %195 = vmatprep.subr.mxu0 0.0
      %196 = vmatpush1.msra.mxu0 %v163
      %197 = vmatprep.subr.mxu0 0.0
      %198 = vmatpush1.msra.mxu0 %v164
      %199 = vmatprep.subr.mxu0 0.0
      %200 = vmatpush1.msra.mxu0 %v165
      %201 = vmatprep.subr.mxu0 0.0
      %202 = vmatpush1.msra.mxu0 %v166
      %203 = vmatprep.subr.mxu0 0.0
      %204 = vmatpush1.msra.mxu0 %v167
      %205 = vmatprep.subr.mxu0 0.0
      %206 = vmatpush1.msra.mxu0 %v168
      %207 = vmatprep.subr.mxu0 0.0
      %208 = vmatpush1.msra.mxu0 %v169
      %209 = vmatprep.subr.mxu0 0.0
      %210 = vmatpush1.msra.mxu0 0.0
      %211 = vmatprep.subr.mxu0 0.0
      %212 = vmatpush1.msra.mxu0 0.0
      %213 = vmatprep.subr.mxu0 0.0
      %214 = vmatpush1.msra.mxu0 0.0
      %215 = vmatprep.subr.mxu0 0.0
      %216 = vmatpush1.msra.mxu0 0.0
      %217 = vmatprep.subr.mxu0 0.0
      %218 = vmatpush1.msra.mxu0 0.0
      %219 = vmatprep.subr.mxu0 0.0
      %220 = vmatpush1.msra.mxu0 0.0
      %221 = vmatprep.subr.mxu0 0.0
      %222 = vmatpush1.msra.mxu0 0.0
      %223 = vmatprep.subr.mxu0 0.0
      %224 = vmatpush1.msra.mxu0 0.0
      %225 = vmatprep.subr.mxu0 0.0
      %226 = vmatpush1.msra.mxu0 0.0
      %227 = vmatprep.subr.mxu0 0.0
      %228 = vmatpush1.msra.mxu0 0.0
      %229 = vmatprep.subr.mxu0 0.0
      %230 = vmatpush1.msra.mxu0 0.0
      %231 = vmatprep.subr.mxu0 0.0
      %232 = vmatpush1.msra.mxu0 0.0
      %233 = vmatprep.subr.mxu0 0.0
      %234 = vmatpush1.msra.mxu0 0.0
      %235 = vmatprep.subr.mxu0 0.0
      %236 = vmatpush1.msra.mxu0 0.0
      %237 = vmatprep.subr.mxu0 0.0
      %238 = vmatpush1.msra.mxu0 0.0
      %239 = vmatprep.subr.mxu0 0.0
      %240 = vmatpush1.msra.mxu0 0.0
      %241 = vmatprep.mubr.f32.mxu0 0.0
      %242 = vmatmul.mubr.f32.gmra.mrb[0].mxu0 %v153
      %v243 = vpop.f32.mrb[0].mxu0
      %v244 = vadd.f32 %v175, %v243
      %v245 = vpop.f32.mrb[0].mxu0
      %246 = vdwg.mxu0
      %v247 = vtanh.pop %v244
      %v248 = vld [vmem:[#allocation8] sm:$0xff]
      %v249 = vld [vmem:[#allocation8 + $0x8] sm:$0xff]
      %v250 = vld [vmem:[#allocation8 + $0x10] sm:$0xff]
      %v251 = vld [vmem:[#allocation8 + $0x18] sm:$0xff]
      %v252 = vld [vmem:[#allocation8 + $0x20] sm:$0xff]
      %v253 = vld [vmem:[#allocation8 + $0x28] sm:$0xff]
      %v254 = vld [vmem:[#allocation8 + $0x30] sm:$0xff]
      %v255 = vld [vmem:[#allocation8 + $0x38] sm:$0xff]
      %v256 = vld [vmem:[#allocation8 + $0x40] sm:$0xff]
      %v257 = vld [vmem:[#allocation8 + $0x48] sm:$0xff]
      %v258 = vld [vmem:[#allocation8 + $0x50] sm:$0xff]
      %v259 = vld [vmem:[#allocation8 + $0x58] sm:$0xff]
      %v260 = vld [vmem:[#allocation8 + $0x60] sm:$0xff]
      %v261 = vld [vmem:[#allocation8 + $0x68] sm:$0xff]
      %v262 = vld [vmem:[#allocation8 + $0x70] sm:$0xff]
      %v263 = vld [vmem:[#allocation8 + $0x78] sm:$0xff]
      %v264 = vld [vmem:[%s4] sm:$0x1]
      %v266 = vlaneseq
      %v267 = vshrl.u32 %v266, 7
      %v268 = vsub.s32 0, %v267
      %v269 = vrot.slane %v264, %v268
      %271 = vmatprep.subr.mxu0 0.0
      %272 = vmatpush1.msra.mxu0 %v248
      %273 = vmatprep.subr.mxu0 0.0
      %274 = vmatpush1.msra.mxu0 %v249
      %275 = vmatprep.subr.mxu0 0.0
      %276 = vmatpush1.msra.mxu0 %v250
      %277 = vmatprep.subr.mxu0 0.0
      %278 = vmatpush1.msra.mxu0 %v251
      %279 = vmatprep.subr.mxu0 0.0
      %280 = vmatpush1.msra.mxu0 %v252
      %281 = vmatprep.subr.mxu0 0.0
      %282 = vmatpush1.msra.mxu0 %v253
      %283 = vmatprep.subr.mxu0 0.0
      %284 = vmatpush1.msra.mxu0 %v254
      %285 = vmatprep.subr.mxu0 0.0
      %286 = vmatpush1.msra.mxu0 %v255
      %287 = vmatprep.subr.mxu0 0.0
      %288 = vmatpush1.msra.mxu0 %v256
      %289 = vmatprep.subr.mxu0 0.0
      %290 = vmatpush1.msra.mxu0 %v257
      %291 = vmatprep.subr.mxu0 0.0
      %292 = vmatpush1.msra.mxu0 %v258
      %293 = vmatprep.subr.mxu0 0.0
      %294 = vmatpush1.msra.mxu0 %v259
      %295 = vmatprep.subr.mxu0 0.0
      %296 = vmatpush1.msra.mxu0 %v260
      %297 = vmatprep.subr.mxu0 0.0
      %298 = vmatpush1.msra.mxu0 %v261
      %299 = vmatprep.subr.mxu0 0.0
      %300 = vmatpush1.msra.mxu0 %v262
      %301 = vmatprep.subr.mxu0 0.0
      %302 = vmatpush1.msra.mxu0 %v263
      %303 = vmatprep.subr.mxu0 0.0
      %304 = vmatpush1.msra.mxu0 0.0
      %305 = vmatprep.subr.mxu0 0.0
      %306 = vmatpush1.msra.mxu0 0.0
      %307 = vmatprep.subr.mxu0 0.0
      %308 = vmatpush1.msra.mxu0 0.0
      %309 = vmatprep.subr.mxu0 0.0
      %310 = vmatpush1.msra.mxu0 0.0
      %311 = vmatprep.subr.mxu0 0.0
      %312 = vmatpush1.msra.mxu0 0.0
      %313 = vmatprep.subr.mxu0 0.0
      %314 = vmatpush1.msra.mxu0 0.0
      %315 = vmatprep.subr.mxu0 0.0
      %316 = vmatpush1.msra.mxu0 0.0
      %317 = vmatprep.subr.mxu0 0.0
      %318 = vmatpush1.msra.mxu0 0.0
      %319 = vmatprep.subr.mxu0 0.0
      %320 = vmatpush1.msra.mxu0 0.0
      %321 = vmatprep.subr.mxu0 0.0
      %322 = vmatpush1.msra.mxu0 0.0
      %323 = vmatprep.subr.mxu0 0.0
      %324 = vmatpush1.msra.mxu0 0.0
      %325 = vmatprep.subr.mxu0 0.0
      %326 = vmatpush1.msra.mxu0 0.0
      %327 = vmatprep.subr.mxu0 0.0
      %328 = vmatpush1.msra.mxu0 0.0
      %329 = vmatprep.subr.mxu0 0.0
      %330 = vmatpush1.msra.mxu0 0.0
      %331 = vmatprep.subr.mxu0 0.0
      %332 = vmatpush1.msra.mxu0 0.0
      %333 = vmatprep.subr.mxu0 0.0
      %334 = vmatpush1.msra.mxu0 0.0
      %335 = vmatprep.mubr.f32.mxu0 0.0
      %336 = vmatmul.mubr.f32.gmra.mrb[0].mxu0 %v247
      %v337 = vpop.f32.mrb[0].mxu0
      %v338 = vadd.f32 %v269, %v337
      %v339 = vpop.f32.mrb[0].mxu0
      %340 = vdwg.mxu0
      %341 = vst [vmem:[#allocation9] sm:$0xff] %v338
    $region41: #{tpu_custom_call.1} parent=1 // pred_fallthru
      _
    // Predicated region
    $region42: #{tpu_custom_call.1} parent=1 // pred_check
      _
    $region43: #{tpu_custom_call.1} parent=1 // pred_check_branch
      %343 = sbr.rel (0) target = $region45
    $region44: #{tpu_custom_call.1} parent=1 // pred_region
      %s345 = ssub.s32 128, 128
      %346 = vsyncadd [#allocation5], %s345
      %s348 = sshll.u32 [#allocation9], 4
      %s349 = int_to_ptr.vmem [resolvable:$true] %s348
      %351 = dma.vmem_to_hbm [thread:$0]  %s349, 128, %s5, [#allocation5]
    $region45: #{tpu_custom_call.1} parent=1 // pred_fallthru
      _
    // Predicated region
    $region46: #{tpu_custom_call.1} parent=1 // pred_check
      _
    $region47: #{tpu_custom_call.1} parent=1 // pred_check_branch
      %353 = sbr.rel (0) target = $region49
    $region48: #{tpu_custom_call.1} parent=1 // pred_region
      %354 = dma.done [#allocation5], 128
    $region49: #{tpu_custom_call.1} parent=1 // pred_fallthru
      _
    %355 = vsyncpa [#allocation4], 1
    %356 = vsyncpa [#allocation7], 1
    %357 = vsyncpa [#allocation5], 1

</llo_original>
